<compile_context>
chip_gen: v5e
topology: v5e:2x2
jax: 0.10.0
libtpu: 0.0.40
codegen_flags: <defaults>
</compile_context>

<pallas_src>
import functools

import jax
import jax.numpy as jnp
import numpy as np
from jax.experimental import pallas as pl
from jax.experimental.pallas import tpu as pltpu

_NEG = -1e30          # finite "-inf": exp(_NEG - finite) == 0, no 0*inf NaNs


def _round_up(x, m):
    return ((x + m - 1) // m) * m


def _proxy_loss_kernel(feat_row_ref, feat_col_ref, pred_ref, tgt_col_ref,
                       tgt_row_ref, loss_ref, m_scr, s_scr, *, scale, thres):
    k = pl.program_id(1)
    nk = pl.num_programs(1)

    # Targets: per-row column (resident across k) and per-column row.
    t_i = tgt_col_ref[...]                                   # (tm, 1) int32
    t_j = tgt_row_ref[...]                                   # (1, tk) int32

    # (tm, tk) cosine-similarity tile on the MXU.  Features are already
    # unit-norm and already in the matmul dtype; accumulate in f32.
    sim = jnp.einsum("id,jd->ij", feat_row_ref[...], feat_col_ref[...],
                     preferred_element_type=jnp.float32)

    # Fused label + threshold mask.  The reference zeroes same-label entries
    # and then masks anything < thres; with thres > 0 that is the same as
    # masking every same-label pair directly.
    masked = (t_i == t_j) | (sim < thres)
    z_sim = jnp.where(masked, _NEG, scale * sim)

    # Seed the online logsumexp from the (k-resident) class logits at k == 0.
    @pl.when(k == 0)
    def _():
        z_pred = scale * pred_ref[...]
        m0 = jnp.max(z_pred, axis=1, keepdims=True)
        m_scr[...] = m0
        s_scr[...] = jnp.sum(jnp.exp(z_pred - m0), axis=1, keepdims=True)

    m_old = m_scr[...]
    s_old = s_scr[...]
    m_new = jnp.maximum(m_old, jnp.max(z_sim, axis=1, keepdims=True))
    s_new = (s_old * jnp.exp(m_old - m_new)
             + jnp.sum(jnp.exp(z_sim - m_new), axis=1, keepdims=True))
    m_scr[...] = m_new
    s_scr[...] = s_new

    # Finalize: per-row NLL = logsumexp - z[target], broadcast across all 128
    # lanes so the writeback is an unmasked full-lane store.
    @pl.when(k == nk - 1)
    def _():
        z_pred = scale * pred_ref[...]                       # (tm, c_pad)
        col_ids = jax.lax.broadcasted_iota(jnp.int32, z_pred.shape, 1)
        z_target = jnp.sum(jnp.where(col_ids == t_i, z_pred, 0.0),
                           axis=1, keepdims=True)
        loss_col = m_scr[...] + jnp.log(s_scr[...]) - z_target   # (tm, 1)
        loss_ref[...] = jnp.broadcast_to(loss_col, loss_ref.shape)


def proxy_loss(feature, pred, target, *, scale=1.0, thres=0.1,
               block_m=None, block_k=None, matmul_dtype=jnp.bfloat16,
               col_buffers=3):
    """ProxyLoss forward: mean NLL of log_softmax(scale*[pred | masked_sim])."""
    B, D = feature.shape
    C = pred.shape[1]
    # Kernel masks same-label pairs unconditionally; equivalent to the
    # reference (which zeroes them first) only when thres > 0.
    assert thres > 0.0, "proxy_loss kernel assumes thres > 0 (reference default 0.1)"

    d_pad = _round_up(max(D, 128), 128)
    c_pad = _round_up(max(C, 128), 128)

    # ---- tile selection ------------------------------------------------------
    if block_m is None:
        # >= 2 row tiles whenever B > 128 so a v7x megacore can shard the
        # "parallel" row axis across both TensorCores.
        block_m = 256 if B > 256 else 128
    assert block_m % 8 == 0
    b_pad = _round_up(B, block_m)
    if block_k is None:
        block_k = b_pad
        for cand in (512, 384, 256, 128):     # widest reduction tile that tiles b_pad
            if b_pad % cand == 0:
                block_k = cand
                break
    assert b_pad % block_k == 0
    assert block_k % 128 == 0 or block_k == b_pad
    nb = b_pad // block_m
    nk = b_pad // block_k

    # ---- host-side prep: normalize once (f32), pad, cast to matmul dtype ----
    feat32 = feature.astype(jnp.float32)
    norm = jnp.sqrt(jnp.sum(feat32 * feat32, axis=1, keepdims=True))
    feat_n = feat32 / jnp.maximum(norm, 1e-12)            # F.normalize semantics
    feat_p = (jnp.zeros((b_pad, d_pad), jnp.float32)
              .at[:B, :D].set(feat_n)).astype(matmul_dtype)
    pred_p = jnp.full((b_pad, c_pad), _NEG, jnp.float32).at[:B, :C].set(
        pred.astype(jnp.float32))
    tgt = target.astype(jnp.int32)
    tgt_col = jnp.zeros((b_pad, 1), jnp.int32).at[:B, 0].set(tgt)
    tgt_row = jnp.zeros((1, b_pad), jnp.int32).at[0, :B].set(tgt)

    # ---- BlockSpecs ----------------------------------------------------------
    n_col_buf = max(2, min(int(col_buffers), nk))
    col_kwargs = dict(pipeline_mode=pl.Buffered(n_col_buf)) if n_col_buf > 2 else {}
    in_specs = [
        pl.BlockSpec((block_m, d_pad), lambda i, k: (i, 0)),               # feat rows
        pl.BlockSpec((block_k, d_pad), lambda i, k: (k, 0), **col_kwargs),  # feat cols
        pl.BlockSpec((block_m, c_pad), lambda i, k: (i, 0)),               # class logits
        pl.BlockSpec((block_m, 1), lambda i, k: (i, 0)),                   # targets (rows)
        pl.BlockSpec((1, block_k), lambda i, k: (0, k), **col_kwargs),     # targets (cols)
    ]
    out_spec = pl.BlockSpec((block_m, 128), lambda i, k: (i, 0))

    # ---- VMEM budget (v7x: 64 MiB physical / 32 MiB default scoped;
    #      v5e default scoped is only 16 MiB) --------------------------------
    fbytes = jnp.dtype(matmul_dtype).itemsize
    vmem_est = (2 * block_m * d_pad * fbytes            # row feature tiles (x2 buf)
                + n_col_buf * block_k * d_pad * fbytes  # column feature tiles
                + 2 * block_m * c_pad * 4               # pred tiles (f32)
                + 2 * block_m * 128 * 4                 # loss output tiles
                + 2 * block_m * 128 * 4                 # (block_m,1) targets, lane-padded
                + 2 * 8 * block_k * 4                   # (1,block_k) targets, sublane-padded
                + 2 * block_m * 128 * 4                 # m/s scratch, lane-padded
                + 2 * block_m * block_k * 4)            # sim / z_sim temporaries
    vmem_limit = int(min(max(vmem_est * 3 // 2 + (2 << 20), 16 << 20), 64 << 20))

    kernel = functools.partial(_proxy_loss_kernel, scale=float(scale),
                               thres=float(thres))

    per_row = pl.pallas_call(
        kernel,
        out_shape=jax.ShapeDtypeStruct((b_pad, 128), jnp.float32),
        grid_spec=pltpu.PrefetchScalarGridSpec(
            num_scalar_prefetch=0,
            grid=(nb, nk),
            in_specs=in_specs,
            out_specs=out_spec,
            scratch_shapes=[pltpu.VMEM((block_m, 1), jnp.float32),
                            pltpu.VMEM((block_m, 1), jnp.float32)],
        ),
        compiler_params=pltpu.CompilerParams(
            dimension_semantics=("parallel", "arbitrary"),
            vmem_limit_bytes=vmem_limit),
    )(feat_p, feat_p, pred_p, tgt_col, tgt_row)

    # Padded rows carry garbage; keep this slice before the mean.
    return jnp.mean(per_row[:B, 0])


def proxy_loss_ref(feature, pred, target, scale=1.0, thres=0.1):
    # Pure-JAX reference mirroring the PyTorch module, for verification.
    norm = jnp.sqrt(jnp.sum(feature ** 2, axis=1, keepdims=True))
    f = feature / jnp.maximum(norm, 1e-12)
    sim = jnp.matmul(f, f.T, precision=jax.lax.Precision.HIGHEST)
    label = target[:, None] == target[None, :]
    sim = sim * (~label)
    sim = jnp.where(sim < thres, -jnp.inf, sim)
    logits = scale * jnp.concatenate([pred, sim], axis=1)
    logp = jax.nn.log_softmax(logits, axis=1)
    return -jnp.mean(logp[jnp.arange(feature.shape[0]), target])


def _make_inputs(key, B, D, C=4):
    # Class-prototype features with tiny noise so every cross-sample cosine is
    # far from the 0.1 threshold (robust to bf16 rounding kernel vs ref) while
    # still exercising both the kept (>thres) and masked (<thres) paths.
    k_noise, k_pred = jax.random.split(key)
    target = (jnp.arange(B) % C).astype(jnp.int32)
    inv = float(1.0 / np.sqrt(2.0))
    base = jnp.zeros((C, D), jnp.float32)
    base = base.at[0, 0].set(1.0)
    base = base.at[1, 0].set(inv).at[1, 1].set(inv)   # cos(c0,c1) ~ 0.707 kept
    base = base.at[2, 2].set(1.0)                      # orthogonal -> masked
    base = base.at[3, 3].set(1.0)
    feature = base[target] + 0.003 * jax.random.normal(k_noise, (B, D),
                                                       jnp.float32)
    pred = jax.random.normal(k_pred, (B, C), jnp.float32)
    return feature, pred, target


if __name__ == "__main__":
    key = jax.random.PRNGKey(0)
    k1, k2, k3 = jax.random.split(key, 3)

    # Case 1: tiny single-tile problem, exact f32 matmul path, tight tolerance.
    B, D, C = 8, 32, 4
    feature, pred, target = _make_inputs(k1, B, D, C)
    loss = jax.block_until_ready(
        proxy_loss(feature, pred, target, matmul_dtype=jnp.float32))
    loss_ref = jax.block_until_ready(proxy_loss_ref(feature, pred, target))
    np.testing.assert_allclose(np.asarray(loss), np.asarray(loss_ref),
                               rtol=1e-4, atol=1e-4)

    # Case 2: default fast path (bf16 features on the MXU), auto tiles
    # (2 row tiles on the parallel axis, one reduction tile).  bf16 sims need
    # a looser tolerance vs the HIGHEST-precision reference.
    B2 = 200
    feature2, pred2, target2 = _make_inputs(k2, B2, D, C)
    loss2 = jax.block_until_ready(proxy_loss(feature2, pred2, target2))
    loss2_ref = jax.block_until_ready(proxy_loss_ref(feature2, pred2, target2))
    np.testing.assert_allclose(np.asarray(loss2), np.asarray(loss2_ref),
                               rtol=1e-2, atol=1e-2)

    # Case 3: explicit 128x128 tiles -> 3x3 grid exercising the multi-step
    # online-logsumexp sweep, per-row-tile accumulator re-seed and the
    # Buffered(3) column stream.
    B3 = 300
    feature3, pred3, target3 = _make_inputs(k3, B3, D, C)
    loss3 = jax.block_until_ready(
        proxy_loss(feature3, pred3, target3, block_m=128, block_k=128))
    loss3_ref = jax.block_until_ready(proxy_loss_ref(feature3, pred3, target3))
    np.testing.assert_allclose(np.asarray(loss3), np.asarray(loss3_ref),
                               rtol=1e-2, atol=1e-2)

    print("KERNEL_OK")
</pallas_src>

<mosaic_0001>
module attributes {stable_mosaic.version = 11 : i64} {
  func.func @_proxy_loss_kernel(%arg0: i32, %arg1: i32, %arg2: memref<128x128xf32, #tpu.memory_space<vmem>>, %arg3: memref<128x128xf32, #tpu.memory_space<vmem>>, %arg4: memref<128x128xf32, #tpu.memory_space<vmem>>, %arg5: memref<128x1xi32, #tpu.memory_space<vmem>>, %arg6: memref<1x128xi32, #tpu.memory_space<vmem>>, %arg7: memref<128x128xf32, #tpu.memory_space<vmem>>, %arg8: memref<128x1xf32, #tpu.memory_space<vmem>>, %arg9: memref<128x1xf32, #tpu.memory_space<vmem>>) attributes {dimension_semantics = [#tpu.dimension_semantics<parallel>, #tpu.dimension_semantics<arbitrary>], iteration_bounds = array<i64: 1, 1>, scalar_prefetch = 0 : i64, scratch_operands = 2 : i64, tpu.core_type = #tpu.core_type<tc>, window_params = [{transform_indices = @transform_0, window_bounds = array<i64: 128, 128>}, {transform_indices = @transform_1, window_bounds = array<i64: 128, 128>}, {transform_indices = @transform_2, window_bounds = array<i64: 128, 128>}, {transform_indices = @transform_3, window_bounds = array<i64: 128, 1>}, {transform_indices = @transform_4, window_bounds = array<i64: 1, 128>}, {transform_indices = @transform_5, window_bounds = array<i64: 128, 128>}]} {
    %c0 = arith.constant 0 : index
    %c0_0 = arith.constant 0 : index
    %0 = vector.load %arg5[%c0, %c0_0] : memref<128x1xi32, #tpu.memory_space<vmem>>, vector<128x1xi32>
    %c0_1 = arith.constant 0 : index
    %c0_2 = arith.constant 0 : index
    %1 = vector.load %arg6[%c0_1, %c0_2] : memref<1x128xi32, #tpu.memory_space<vmem>>, vector<1x128xi32>
    %c0_3 = arith.constant 0 : index
    %c0_4 = arith.constant 0 : index
    %2 = vector.load %arg2[%c0_3, %c0_4] : memref<128x128xf32, #tpu.memory_space<vmem>>, vector<128x128xf32>
    %c0_5 = arith.constant 0 : index
    %c0_6 = arith.constant 0 : index
    %3 = vector.load %arg3[%c0_5, %c0_6] : memref<128x128xf32, #tpu.memory_space<vmem>>, vector<128x128xf32>
    "tpu.trace_start"() <{level = 10 : i32, message = "id,jd->ij"}> : () -> ()
    %cst = arith.constant dense<0.000000e+00> : vector<128x128xf32>
    %4 = tpu.matmul %2, %3, %cst {dimension_numbers = #tpu.dot_dimension_numbers<[1], [1], [0], [0], [0, 0, 1, 0], [], []>} : vector<128x128xf32>, vector<128x128xf32>, vector<128x128xf32> -> vector<128x128xf32>
    "tpu.trace_stop"() : () -> ()
    %5 = vector.broadcast %0 : vector<128x1xi32> to vector<128x128xi32>
    %6 = vector.broadcast %1 : vector<1x128xi32> to vector<128x128xi32>
    %7 = arith.cmpi eq, %5, %6 : vector<128x128xi32>
    %cst_7 = arith.constant 1.000000e-01 : f32
    %8 = vector.broadcast %cst_7 : f32 to vector<128x128xf32>
    %9 = arith.cmpf olt, %4, %8 : vector<128x128xf32>
    %10 = arith.ori %7, %9 : vector<128x128xi1>
    %cst_8 = arith.constant 1.000000e+00 : f32
    %11 = vector.broadcast %cst_8 : f32 to vector<128x128xf32>
    %12 = arith.mulf %11, %4 : vector<128x128xf32>
    %cst_9 = arith.constant -1.000000e+30 : f32
    %13 = vector.broadcast %cst_9 : f32 to vector<128x128xf32>
    %14 = arith.select %10, %13, %12 : vector<128x128xi1>, vector<128x128xf32>
    %c0_i32 = arith.constant 0 : i32
    %15 = arith.cmpi eq, %arg1, %c0_i32 : i32
    %16 = arith.extui %15 : i1 to i32
    %c0_i32_10 = arith.constant 0 : i32
    %17 = arith.cmpi ne, %16, %c0_i32_10 : i32
    scf.if %17 {
      %c0_23 = arith.constant 0 : index
      %c0_24 = arith.constant 0 : index
      %37 = vector.load %arg4[%c0_23, %c0_24] : memref<128x128xf32, #tpu.memory_space<vmem>>, vector<128x128xf32>
      %cst_25 = arith.constant 1.000000e+00 : f32
      %38 = vector.broadcast %cst_25 : f32 to vector<128x128xf32>
      %39 = arith.mulf %38, %37 : vector<128x128xf32>
      %cst_26 = arith.constant dense<0xFF800000> : vector<128xf32>
      %40 = vector.multi_reduction <maximumf>, %39, %cst_26 [1] : vector<128x128xf32> to vector<128xf32>
      %41 = vector.shape_cast %40 : vector<128xf32> to vector<128x1xf32>
      %c0_27 = arith.constant 0 : index
      %c0_28 = arith.constant 0 : index
      %42 = vector.load %arg8[%c0_27, %c0_28] : memref<128x1xf32, #tpu.memory_space<vmem>>, vector<128x1xf32>
      tpu.vector_store %arg8[%c0_27, %c0_28], %41 {strides = array<i32>} : memref<128x1xf32, #tpu.memory_space<vmem>>, vector<128x1xf32>,
      %43 = vector.broadcast %41 : vector<128x1xf32> to vector<128x128xf32>
      %44 = arith.subf %39, %43 : vector<128x128xf32>
      %45 = math.exp %44 : vector<128x128xf32>
      %cst_29 = arith.constant dense<0.000000e+00> : vector<128xf32>
      %46 = vector.multi_reduction <add>, %45, %cst_29 [1] : vector<128x128xf32> to vector<128xf32>
      %47 = vector.shape_cast %46 : vector<128xf32> to vector<128x1xf32>
      %c0_30 = arith.constant 0 : index
      %c0_31 = arith.constant 0 : index
      %48 = vector.load %arg9[%c0_30, %c0_31] : memref<128x1xf32, #tpu.memory_space<vmem>>, vector<128x1xf32>
      tpu.vector_store %arg9[%c0_30, %c0_31], %47 {strides = array<i32>} : memref<128x1xf32, #tpu.memory_space<vmem>>, vector<128x1xf32>,
    } else {
    }
    %c0_11 = arith.constant 0 : index
    %c0_12 = arith.constant 0 : index
    %18 = vector.load %arg8[%c0_11, %c0_12] : memref<128x1xf32, #tpu.memory_space<vmem>>, vector<128x1xf32>
    %c0_13 = arith.constant 0 : index
    %c0_14 = arith.constant 0 : index
    %19 = vector.load %arg9[%c0_13, %c0_14] : memref<128x1xf32, #tpu.memory_space<vmem>>, vector<128x1xf32>
    %cst_15 = arith.constant dense<0xFF800000> : vector<128xf32>
    %20 = vector.multi_reduction <maximumf>, %14, %cst_15 [1] : vector<128x128xf32> to vector<128xf32>
    %21 = vector.shape_cast %20 : vector<128xf32> to vector<128x1xf32>
    %22 = arith.maximumf %18, %21 : vector<128x1xf32>
    %23 = arith.subf %18, %22 : vector<128x1xf32>
    %24 = math.exp %23 : vector<128x1xf32>
    %25 = arith.mulf %19, %24 : vector<128x1xf32>
    %26 = vector.broadcast %22 : vector<128x1xf32> to vector<128x128xf32>
    %27 = arith.subf %14, %26 : vector<128x128xf32>
    %28 = math.exp %27 : vector<128x128xf32>
    %cst_16 = arith.constant dense<0.000000e+00> : vector<128xf32>
    %29 = vector.multi_reduction <add>, %28, %cst_16 [1] : vector<128x128xf32> to vector<128xf32>
    %30 = vector.shape_cast %29 : vector<128xf32> to vector<128x1xf32>
    %31 = arith.addf %25, %30 : vector<128x1xf32>
    %c0_17 = arith.constant 0 : index
    %c0_18 = arith.constant 0 : index
    %32 = vector.load %arg8[%c0_17, %c0_18] : memref<128x1xf32, #tpu.memory_space<vmem>>, vector<128x1xf32>
    tpu.vector_store %arg8[%c0_17, %c0_18], %22 {strides = array<i32>} : memref<128x1xf32, #tpu.memory_space<vmem>>, vector<128x1xf32>,
    %c0_19 = arith.constant 0 : index
    %c0_20 = arith.constant 0 : index
    %33 = vector.load %arg9[%c0_19, %c0_20] : memref<128x1xf32, #tpu.memory_space<vmem>>, vector<128x1xf32>
    tpu.vector_store %arg9[%c0_19, %c0_20], %31 {strides = array<i32>} : memref<128x1xf32, #tpu.memory_space<vmem>>, vector<128x1xf32>,
    %c0_i32_21 = arith.constant 0 : i32
    %34 = arith.cmpi eq, %arg1, %c0_i32_21 : i32
    %35 = arith.extui %34 : i1 to i32
    %c0_i32_22 = arith.constant 0 : i32
    %36 = arith.cmpi ne, %35, %c0_i32_22 : i32
    scf.if %36 {
      %c0_23 = arith.constant 0 : index
      %c0_24 = arith.constant 0 : index
      %37 = vector.load %arg4[%c0_23, %c0_24] : memref<128x128xf32, #tpu.memory_space<vmem>>, vector<128x128xf32>
      %cst_25 = arith.constant 1.000000e+00 : f32
      %38 = vector.broadcast %cst_25 : f32 to vector<128x128xf32>
      %39 = arith.mulf %38, %37 : vector<128x128xf32>
      %40 = tpu.iota {dimensions = array<i32: 1>} : vector<128x128xi32>
      %41 = vector.broadcast %0 : vector<128x1xi32> to vector<128x128xi32>
      %42 = arith.cmpi eq, %40, %41 : vector<128x128xi32>
      %cst_26 = arith.constant 0.000000e+00 : f32
      %43 = vector.broadcast %cst_26 : f32 to vector<128x128xf32>
      %44 = arith.select %42, %39, %43 : vector<128x128xi1>, vector<128x128xf32>
      %cst_27 = arith.constant dense<0.000000e+00> : vector<128xf32>
      %45 = vector.multi_reduction <add>, %44, %cst_27 [1] : vector<128x128xf32> to vector<128xf32>
      %46 = vector.shape_cast %45 : vector<128xf32> to vector<128x1xf32>
      %c0_28 = arith.constant 0 : index
      %c0_29 = arith.constant 0 : index
      %47 = vector.load %arg8[%c0_28, %c0_29] : memref<128x1xf32, #tpu.memory_space<vmem>>, vector<128x1xf32>
      %c0_30 = arith.constant 0 : index
      %c0_31 = arith.constant 0 : index
      %48 = vector.load %arg9[%c0_30, %c0_31] : memref<128x1xf32, #tpu.memory_space<vmem>>, vector<128x1xf32>
      %49 = math.log %48 : vector<128x1xf32>
      %50 = arith.addf %47, %49 : vector<128x1xf32>
      %51 = arith.subf %50, %46 : vector<128x1xf32>
      %52 = vector.shape_cast %51 : vector<128x1xf32> to vector<128x1xf32>
      %53 = vector.broadcast %52 : vector<128x1xf32> to vector<128x128xf32>
      %c0_32 = arith.constant 0 : index
      %c0_33 = arith.constant 0 : index
      %54 = vector.load %arg7[%c0_32, %c0_33] : memref<128x128xf32, #tpu.memory_space<vmem>>, vector<128x128xf32>
      tpu.vector_store %arg7[%c0_32, %c0_33], %53 {strides = array<i32>} : memref<128x128xf32, #tpu.memory_space<vmem>>, vector<128x128xf32>,
    } else {
    }
    return
  }
  func.func @transform_0(%arg0: i32, %arg1: i32) -> (i32, i32) {
    %c0_i32 = arith.constant 0 : i32
    %c0_i32_0 = arith.constant 0 : i32
    return %arg0, %c0_i32 : i32, i32
  }
  func.func @transform_1(%arg0: i32, %arg1: i32) -> (i32, i32) {
    %c0_i32 = arith.constant 0 : i32
    %c0_i32_0 = arith.constant 0 : i32
    return %arg1, %c0_i32 : i32, i32
  }
  func.func @transform_2(%arg0: i32, %arg1: i32) -> (i32, i32) {
    %c0_i32 = arith.constant 0 : i32
    %c0_i32_0 = arith.constant 0 : i32
    return %arg0, %c0_i32 : i32, i32
  }
  func.func @transform_3(%arg0: i32, %arg1: i32) -> (i32, i32) {
    %c0_i32 = arith.constant 0 : i32
    %c0_i32_0 = arith.constant 0 : i32
    return %arg0, %c0_i32 : i32, i32
  }
  func.func @transform_4(%arg0: i32, %arg1: i32) -> (i32, i32) {
    %c0_i32 = arith.constant 0 : i32
    %c0_i32_0 = arith.constant 0 : i32
    return %c0_i32, %arg1 : i32, i32
  }
  func.func @transform_5(%arg0: i32, %arg1: i32) -> (i32, i32) {
    %c0_i32 = arith.constant 0 : i32
    %c0_i32_0 = arith.constant 0 : i32
    return %arg0, %c0_i32 : i32, i32
  }
}

</mosaic_0001>

<llo_original>
// kernel: tpu_custom_call.1
$region0: #{tpu_custom_call.1}
  #allocation0 [shape = 'u32[]', space=smem, size = 0x4, offset = 0x4, fixed_abs, tag = 'smem constant byte address 0x4 - core index']
  #allocation1 [shape = 'u32[72,128]{1,0:T(1,128)}', space=vmem, size = 0x9000, scoped, tag = 'internal scratch']
  #allocation2 [shape = 'f32[128,1]{1,0:T(8,128)}', space=vmem, size = 0x10000, scoped, tag = 'scratch operand']
  #allocation3 [shape = 'f32[128,1]{1,0:T(8,128)}', space=vmem, size = 0x10000, scoped, tag = 'scratch operand']
  %s0 = inlined_call_operand.vmem [shape: f32[128,128], index: 0, kind: input, shape index: {}]
  %s1 = inlined_call_operand.hbm [shape: f32[128,128], index: 1, kind: input, shape index: {}]
  %s2 = inlined_call_operand.hbm [shape: f32[128,128], index: 2, kind: input, shape index: {}]
  %s3 = inlined_call_operand.vmem [shape: s32[128,1], index: 3, kind: input, shape index: {}]
  %s4 = inlined_call_operand.vmem [shape: s32[1,128], index: 4, kind: input, shape index: {}]
  %s5 = inlined_call_operand.hbm [shape: f32[128,128], index: 5, kind: output, shape index: {}]
  %s6 = sld [smem:[#allocation0]]
  $region46: #{tpu_custom_call.1} parent=0
    _
  %s8 = ssub.s32 1, %s6
  %s9 = scalar_select 0, %s8, %s6
  $region1: #{tpu_custom_call.1} parent=0
    #allocation4 [shape = 'u8[65536]{0}', space=vmem, size = 0x10000, scoped, tag = 'input window, operand 1, single buffered']
    #allocation5 [shape = 's32[1]{0}', space=sflag, size = 0x4, scoped, tag = 'scoped memory for tpu_custom_call.1']
    #allocation6 [shape = 's32[1]{0}', space=sflag, size = 0x4, scoped, tag = 'scoped memory for tpu_custom_call.1']
    #allocation7 [shape = 'u8[65536]{0}', space=vmem, size = 0x10000, scoped, tag = 'input window, operand 2, single buffered']
    #allocation8 [shape = 's32[1]{0}', space=sflag, size = 0x4, scoped, tag = 'scoped memory for tpu_custom_call.1']
    #allocation9 [shape = 'u8[65536]{0}', space=vmem, size = 0x10000, scoped, tag = 'output window, operand 0, single buffered']
    %10 = vsyncpa [#allocation5], 0
    %11 = vsyncpa [#allocation8], 0
    %12 = vsyncpa [#allocation6], 0
    // Predicated region
    $region2: #{tpu_custom_call.1} parent=1 // pred_check
      _
    $region3: #{tpu_custom_call.1} parent=1 // pred_check_branch
      %14 = sbr.rel (0) target = $region5
    $region4: #{tpu_custom_call.1} parent=1 // pred_region
      _
    $region5: #{tpu_custom_call.1} parent=1 // pred_fallthru
      _
    // Predicated region
    $region6: #{tpu_custom_call.1} parent=1 // pred_check
      _
    $region7: #{tpu_custom_call.1} parent=1 // pred_check_branch
      %16 = sbr.rel (0) target = $region9
    $region8: #{tpu_custom_call.1} parent=1 // pred_region
      %18 = vsyncadd [#allocation5], 0
      %s19 = sshll.u32 %s1, 4
      %s20 = int_to_ptr.hbm [resolvable:$true] %s19
      %s21 = sshll.u32 [#allocation4], 4
      %s22 = int_to_ptr.vmem [resolvable:$true] %s21
      %27 = dma.hbm_to_vmem [thread:$0]  %s20, 2048, %s22, [#allocation5], 128, 128, 8
    $region9: #{tpu_custom_call.1} parent=1 // pred_fallthru
      _
    // Predicated region
    $region10: #{tpu_custom_call.1} parent=1 // pred_check
      _
    $region11: #{tpu_custom_call.1} parent=1 // pred_check_branch
      %29 = sbr.rel (0) target = $region13
    $region12: #{tpu_custom_call.1} parent=1 // pred_region
      %31 = vsyncadd [#allocation8], 0
      %s32 = sshll.u32 %s2, 4
      %s33 = int_to_ptr.hbm [resolvable:$true] %s32
      %s34 = sshll.u32 [#allocation7], 4
      %s35 = int_to_ptr.vmem [resolvable:$true] %s34
      %40 = dma.hbm_to_vmem [thread:$0]  %s33, 2048, %s35, [#allocation8], 128, 128, 8
    $region13: #{tpu_custom_call.1} parent=1 // pred_fallthru
      _
    // Predicated region
    $region14: #{tpu_custom_call.1} parent=1 // pred_check
      _
    $region15: #{tpu_custom_call.1} parent=1 // pred_check_branch
      %42 = sbr.rel (0) target = $region17
    $region16: #{tpu_custom_call.1} parent=1 // pred_region
      _
    $region17: #{tpu_custom_call.1} parent=1 // pred_fallthru
      _
    // Predicated region
    $region18: #{tpu_custom_call.1} parent=1 // pred_check
      _
    $region19: #{tpu_custom_call.1} parent=1 // pred_check_branch
      %44 = sbr.rel (0) target = $region21
    $region20: #{tpu_custom_call.1} parent=1 // pred_region
      _
    $region21: #{tpu_custom_call.1} parent=1 // pred_fallthru
      _
    // Predicated region
    $region22: #{tpu_custom_call.1} parent=1 // pred_check
      _
    $region23: #{tpu_custom_call.1} parent=1 // pred_check_branch
      %46 = sbr.rel (0) target = $region25
    $region24: #{tpu_custom_call.1} parent=1 // pred_region
      %48 = dma.done [#allocation5], 2048
    $region25: #{tpu_custom_call.1} parent=1 // pred_fallthru
      _
    // Predicated region
    $region26: #{tpu_custom_call.1} parent=1 // pred_check
      _
    $region27: #{tpu_custom_call.1} parent=1 // pred_check_branch
      %50 = sbr.rel (0) target = $region29
    $region28: #{tpu_custom_call.1} parent=1 // pred_region
      %52 = dma.done [#allocation8], 2048
    $region29: #{tpu_custom_call.1} parent=1 // pred_fallthru
      _
    %v53 = vld [vmem:[%s3] sm:$0xff]
    %v54 = vld [vmem:[%s3 + $0x8] sm:$0xff]
    %v55 = vld [vmem:[%s3 + $0x10] sm:$0xff]
    %v56 = vld [vmem:[%s3 + $0x18] sm:$0xff]
    %v57 = vld [vmem:[%s3 + $0x20] sm:$0xff]
    %v58 = vld [vmem:[%s3 + $0x28] sm:$0xff]
    %v59 = vld [vmem:[%s3 + $0x30] sm:$0xff]
    %v60 = vld [vmem:[%s3 + $0x38] sm:$0xff]
    %v61 = vld [vmem:[%s3 + $0x40] sm:$0xff]
    %v62 = vld [vmem:[%s3 + $0x48] sm:$0xff]
    %v63 = vld [vmem:[%s3 + $0x50] sm:$0xff]
    %v64 = vld [vmem:[%s3 + $0x58] sm:$0xff]
    %v65 = vld [vmem:[%s3 + $0x60] sm:$0xff]
    %v66 = vld [vmem:[%s3 + $0x68] sm:$0xff]
    %v67 = vld [vmem:[%s3 + $0x70] sm:$0xff]
    %v68 = vld [vmem:[%s3 + $0x78] sm:$0xff]
    %v69 = vld [vmem:[%s4] sm:$0x1]
    %v70 = vld [vmem:[%s0] sm:$0xff]
    %v71 = vld [vmem:[%s0 + $0x8] sm:$0xff]
    %v72 = vld [vmem:[%s0 + $0x10] sm:$0xff]
    %v73 = vld [vmem:[%s0 + $0x18] sm:$0xff]
    %v74 = vld [vmem:[%s0 + $0x20] sm:$0xff]
    %v75 = vld [vmem:[%s0 + $0x28] sm:$0xff]
    %v76 = vld [vmem:[%s0 + $0x30] sm:$0xff]
    %v77 = vld [vmem:[%s0 + $0x38] sm:$0xff]
    %v78 = vld [vmem:[%s0 + $0x40] sm:$0xff]
    %v79 = vld [vmem:[%s0 + $0x48] sm:$0xff]
    %v80 = vld [vmem:[%s0 + $0x50] sm:$0xff]
    %v81 = vld [vmem:[%s0 + $0x58] sm:$0xff]
    %v82 = vld [vmem:[%s0 + $0x60] sm:$0xff]
    %v83 = vld [vmem:[%s0 + $0x68] sm:$0xff]
    %v84 = vld [vmem:[%s0 + $0x70] sm:$0xff]
    %v85 = vld [vmem:[%s0 + $0x78] sm:$0xff]
    %v86 = vld [vmem:[#allocation4] sm:$0xff]
    %v87 = vld [vmem:[#allocation4 + $0x8] sm:$0xff]
    %v88 = vld [vmem:[#allocation4 + $0x10] sm:$0xff]
    %v89 = vld [vmem:[#allocation4 + $0x18] sm:$0xff]
    %v90 = vld [vmem:[#allocation4 + $0x20] sm:$0xff]
    %v91 = vld [vmem:[#allocation4 + $0x28] sm:$0xff]
    %v92 = vld [vmem:[#allocation4 + $0x30] sm:$0xff]
    %v93 = vld [vmem:[#allocation4 + $0x38] sm:$0xff]
    %v94 = vld [vmem:[#allocation4 + $0x40] sm:$0xff]
    %v95 = vld [vmem:[#allocation4 + $0x48] sm:$0xff]
    %v96 = vld [vmem:[#allocation4 + $0x50] sm:$0xff]
    %v97 = vld [vmem:[#allocation4 + $0x58] sm:$0xff]
    %v98 = vld [vmem:[#allocation4 + $0x60] sm:$0xff]
    %v99 = vld [vmem:[#allocation4 + $0x68] sm:$0xff]
    %v100 = vld [vmem:[#allocation4 + $0x70] sm:$0xff]
    %v101 = vld [vmem:[#allocation4 + $0x78] sm:$0xff]
    %102 = vmatpush.xpose.msra.mxu0 %v101
    %103 = vmatpush.xpose.msra.mxu0 %v100
    %104 = vmatpush.xpose.msra.mxu0 %v99
    %105 = vmatpush.xpose.msra.mxu0 %v98
    %106 = vmatpush.xpose.msra.mxu0 %v97
    %107 = vmatpush.xpose.msra.mxu0 %v96
    %108 = vmatpush.xpose.msra.mxu0 %v95
    %109 = vmatpush.xpose.msra.mxu0 %v94
    %110 = vmatpush.xpose.msra.mxu0 %v93
    %111 = vmatpush.xpose.msra.mxu0 %v92
    %112 = vmatpush.xpose.msra.mxu0 %v91
    %113 = vmatpush.xpose.msra.mxu0 %v90
    %114 = vmatpush.xpose.msra.mxu0 %v89
    %115 = vmatpush.xpose.msra.mxu0 %v88
    %116 = vmatpush.xpose.msra.mxu0 %v87
    %117 = vmatpush.xpose.msra.mxu0 %v86
    %118 = vmatmul.f32.gmra.mxu0 %v70
    %v119 = vpop.f32.mrf.mxu0
    %v120 = vadd.f32 0.0, %v119
    %121 = vmatmul.f32.gmra.mxu0 %v71
    %v122 = vpop.f32.mrf.mxu0
    %v123 = vadd.f32 0.0, %v122
    %124 = vmatmul.f32.gmra.mxu0 %v72
    %v125 = vpop.f32.mrf.mxu0
    %v126 = vadd.f32 0.0, %v125
    %127 = vmatmul.f32.gmra.mxu0 %v73
    %v128 = vpop.f32.mrf.mxu0
    %v129 = vadd.f32 0.0, %v128
    %130 = vmatmul.f32.gmra.mxu0 %v74
    %v131 = vpop.f32.mrf.mxu0
    %v132 = vadd.f32 0.0, %v131
    %133 = vmatmul.f32.gmra.mxu0 %v75
    %v134 = vpop.f32.mrf.mxu0
    %v135 = vadd.f32 0.0, %v134
    %136 = vmatmul.f32.gmra.mxu0 %v76
    %v137 = vpop.f32.mrf.mxu0
    %v138 = vadd.f32 0.0, %v137
    %139 = vmatmul.f32.gmra.mxu0 %v77
    %v140 = vpop.f32.mrf.mxu0
    %v141 = vadd.f32 0.0, %v140
    %142 = vmatmul.f32.gmra.mxu0 %v78
    %v143 = vpop.f32.mrf.mxu0
    %v144 = vadd.f32 0.0, %v143
    %145 = vmatmul.f32.gmra.mxu0 %v79
    %v146 = vpop.f32.mrf.mxu0
    %v147 = vadd.f32 0.0, %v146
    %148 = vmatmul.f32.gmra.mxu0 %v80
    %v149 = vpop.f32.mrf.mxu0
    %v150 = vadd.f32 0.0, %v149
    %151 = vmatmul.f32.gmra.mxu0 %v81
    %v152 = vpop.f32.mrf.mxu0
    %v153 = vadd.f32 0.0, %v152
    %154 = vmatmul.f32.gmra.mxu0 %v82
    %v155 = vpop.f32.mrf.mxu0
    %v156 = vadd.f32 0.0, %v155
    %157 = vmatmul.f32.gmra.mxu0 %v83
    %v158 = vpop.f32.mrf.mxu0
    %v159 = vadd.f32 0.0, %v158
    %160 = vmatmul.f32.gmra.mxu0 %v84
    %v161 = vpop.f32.mrf.mxu0
    %v162 = vadd.f32 0.0, %v161
    %163 = vmatmul.f32.gmra.mxu0 %v85
    %v164 = vpop.f32.mrf.mxu0
    %v165 = vadd.f32 0.0, %v164
    %166 = vdwg.mxu0
    %167 = vset.pattern.permute.xlu0 0
    %168 = vperm.xlu0 %167, %v53
    %v169 = vpop.permute.xlu0 %168
    %170 = vset.pattern.permute.xlu0 0
    %171 = vperm.xlu0 %170, %v54
    %v172 = vpop.permute.xlu0 %171
    %173 = vset.pattern.permute.xlu0 0
    %174 = vperm.xlu0 %173, %v55
    %v175 = vpop.permute.xlu0 %174
    %176 = vset.pattern.permute.xlu0 0
    %177 = vperm.xlu0 %176, %v56
    %v178 = vpop.permute.xlu0 %177
    %179 = vset.pattern.permute.xlu0 0
    %180 = vperm.xlu0 %179, %v57
    %v181 = vpop.permute.xlu0 %180
    %182 = vset.pattern.permute.xlu0 0
    %183 = vperm.xlu0 %182, %v58
    %v184 = vpop.permute.xlu0 %183
    %185 = vset.pattern.permute.xlu0 0
    %186 = vperm.xlu0 %185, %v59
    %v187 = vpop.permute.xlu0 %186
    %188 = vset.pattern.permute.xlu0 0
    %189 = vperm.xlu0 %188, %v60
    %v190 = vpop.permute.xlu0 %189
    %191 = vset.pattern.permute.xlu0 0
    %192 = vperm.xlu0 %191, %v61
    %v193 = vpop.permute.xlu0 %192
    %194 = vset.pattern.permute.xlu0 0
    %195 = vperm.xlu0 %194, %v62
    %v196 = vpop.permute.xlu0 %195
    %197 = vset.pattern.permute.xlu0 0
    %198 = vperm.xlu0 %197, %v63
    %v199 = vpop.permute.xlu0 %198
    %200 = vset.pattern.permute.xlu0 0
    %201 = vperm.xlu0 %200, %v64
    %v202 = vpop.permute.xlu0 %201
    %203 = vset.pattern.permute.xlu0 0
    %204 = vperm.xlu0 %203, %v65
    %v205 = vpop.permute.xlu0 %204
    %206 = vset.pattern.permute.xlu0 0
    %207 = vperm.xlu0 %206, %v66
    %v208 = vpop.permute.xlu0 %207
    %209 = vset.pattern.permute.xlu0 0
    %210 = vperm.xlu0 %209, %v67
    %v211 = vpop.permute.xlu0 %210
    %212 = vset.pattern.permute.xlu0 0
    %213 = vperm.xlu0 %212, %v68
    %v214 = vpop.permute.xlu0 %213
    %v215 = vperm.slane %v69, 0
    %vm216 = vcmp.eq.s32.totalorder %v169, %v215
    %vm217 = vcmp.eq.s32.totalorder %v172, %v215
    %vm218 = vcmp.eq.s32.totalorder %v175, %v215
    %vm219 = vcmp.eq.s32.totalorder %v178, %v215
    %vm220 = vcmp.eq.s32.totalorder %v181, %v215
    %vm221 = vcmp.eq.s32.totalorder %v184, %v215
    %vm222 = vcmp.eq.s32.totalorder %v187, %v215
    %vm223 = vcmp.eq.s32.totalorder %v190, %v215
    %vm224 = vcmp.eq.s32.totalorder %v193, %v215
    %vm225 = vcmp.eq.s32.totalorder %v196, %v215
    %vm226 = vcmp.eq.s32.totalorder %v199, %v215
    %vm227 = vcmp.eq.s32.totalorder %v202, %v215
    %vm228 = vcmp.eq.s32.totalorder %v205, %v215
    %vm229 = vcmp.eq.s32.totalorder %v208, %v215
    %vm230 = vcmp.eq.s32.totalorder %v211, %v215
    %vm231 = vcmp.eq.s32.totalorder %v214, %v215
    %vm232 = vcmp.lt.f32.partialorder %v120, 0.1
    %vm233 = vcmp.lt.f32.partialorder %v123, 0.1
    %vm234 = vcmp.lt.f32.partialorder %v126, 0.1
    %vm235 = vcmp.lt.f32.partialorder %v129, 0.1
    %vm236 = vcmp.lt.f32.partialorder %v132, 0.1
    %vm237 = vcmp.lt.f32.partialorder %v135, 0.1
    %vm238 = vcmp.lt.f32.partialorder %v138, 0.1
    %vm239 = vcmp.lt.f32.partialorder %v141, 0.1
    %vm240 = vcmp.lt.f32.partialorder %v144, 0.1
    %vm241 = vcmp.lt.f32.partialorder %v147, 0.1
    %vm242 = vcmp.lt.f32.partialorder %v150, 0.1
    %vm243 = vcmp.lt.f32.partialorder %v153, 0.1
    %vm244 = vcmp.lt.f32.partialorder %v156, 0.1
    %vm245 = vcmp.lt.f32.partialorder %v159, 0.1
    %vm246 = vcmp.lt.f32.partialorder %v162, 0.1
    %vm247 = vcmp.lt.f32.partialorder %v165, 0.1
    %vm248 = vmor %vm216, %vm232
    %vm249 = vmor %vm217, %vm233
    %vm250 = vmor %vm218, %vm234
    %vm251 = vmor %vm219, %vm235
    %vm252 = vmor %vm220, %vm236
    %vm253 = vmor %vm221, %vm237
    %vm254 = vmor %vm222, %vm238
    %vm255 = vmor %vm223, %vm239
    %vm256 = vmor %vm224, %vm240
    %vm257 = vmor %vm225, %vm241
    %vm258 = vmor %vm226, %vm242
    %vm259 = vmor %vm227, %vm243
    %vm260 = vmor %vm228, %vm244
    %vm261 = vmor %vm229, %vm245
    %vm262 = vmor %vm230, %vm246
    %vm263 = vmor %vm231, %vm247
    %v264 = vsel %vm248, -1e+30, %v120
    %v265 = vsel %vm249, -1e+30, %v123
    %v266 = vsel %vm250, -1e+30, %v126
    %v267 = vsel %vm251, -1e+30, %v129
    %v268 = vsel %vm252, -1e+30, %v132
    %v269 = vsel %vm253, -1e+30, %v135
    %v270 = vsel %vm254, -1e+30, %v138
    %v271 = vsel %vm255, -1e+30, %v141
    %v272 = vsel %vm256, -1e+30, %v144
    %v273 = vsel %vm257, -1e+30, %v147
    %v274 = vsel %vm258, -1e+30, %v150
    %v275 = vsel %vm259, -1e+30, %v153
    %v276 = vsel %vm260, -1e+30, %v156
    %v277 = vsel %vm261, -1e+30, %v159
    %v278 = vsel %vm262, -1e+30, %v162
    %v279 = vsel %vm263, -1e+30, %v165
    %p280 = scmp.eq.s32.totalorder 0, 0
    // Predicated region
    $region30: #{tpu_custom_call.1} parent=1 // pred_check
      %p281 = pneg %p280
    $region31: #{tpu_custom_call.1} parent=1 // pred_check_branch
      %283 = sbr.rel (%p281) target = $region33
    $region32: #{tpu_custom_call.1} parent=1 // pred_region
      %v284 = vld [vmem:[#allocation7] sm:$0xff]
      %v285 = vld [vmem:[#allocation7 + $0x8] sm:$0xff]
      %v286 = vld [vmem:[#allocation7 + $0x10] sm:$0xff]
      %v287 = vld [vmem:[#allocation7 + $0x18] sm:$0xff]
      %v288 = vld [vmem:[#allocation7 + $0x20] sm:$0xff]
      %v289 = vld [vmem:[#allocation7 + $0x28] sm:$0xff]
      %v290 = vld [vmem:[#allocation7 + $0x30] sm:$0xff]
      %v291 = vld [vmem:[#allocation7 + $0x38] sm:$0xff]
      %v292 = vld [vmem:[#allocation7 + $0x40] sm:$0xff]
      %v293 = vld [vmem:[#allocation7 + $0x48] sm:$0xff]
      %v294 = vld [vmem:[#allocation7 + $0x50] sm:$0xff]
      %v295 = vld [vmem:[#allocation7 + $0x58] sm:$0xff]
      %v296 = vld [vmem:[#allocation7 + $0x60] sm:$0xff]
      %v297 = vld [vmem:[#allocation7 + $0x68] sm:$0xff]
      %v298 = vld [vmem:[#allocation7 + $0x70] sm:$0xff]
      %v299 = vld [vmem:[#allocation7 + $0x78] sm:$0xff]
      %300 = vmax.xlane.f32.xlu0 %v284
      %v301 = vpop.xlane.xlu0 %300
      %302 = vmax.xlane.f32.xlu0 %v285
      %v303 = vpop.xlane.xlu0 %302
      %304 = vmax.xlane.f32.xlu0 %v286
      %v305 = vpop.xlane.xlu0 %304
      %306 = vmax.xlane.f32.xlu0 %v287
      %v307 = vpop.xlane.xlu0 %306
      %308 = vmax.xlane.f32.xlu0 %v288
      %v309 = vpop.xlane.xlu0 %308
      %310 = vmax.xlane.f32.xlu0 %v289
      %v311 = vpop.xlane.xlu0 %310
      %312 = vmax.xlane.f32.xlu0 %v290
      %v313 = vpop.xlane.xlu0 %312
      %314 = vmax.xlane.f32.xlu0 %v291
      %v315 = vpop.xlane.xlu0 %314
      %316 = vmax.xlane.f32.xlu0 %v292
      %v317 = vpop.xlane.xlu0 %316
      %318 = vmax.xlane.f32.xlu0 %v293
      %v319 = vpop.xlane.xlu0 %318
      %320 = vmax.xlane.f32.xlu0 %v294
      %v321 = vpop.xlane.xlu0 %320
      %322 = vmax.xlane.f32.xlu0 %v295
      %v323 = vpop.xlane.xlu0 %322
      %324 = vmax.xlane.f32.xlu0 %v296
      %v325 = vpop.xlane.xlu0 %324
      %326 = vmax.xlane.f32.xlu0 %v297
      %v327 = vpop.xlane.xlu0 %326
      %328 = vmax.xlane.f32.xlu0 %v298
      %v329 = vpop.xlane.xlu0 %328
      %330 = vmax.xlane.f32.xlu0 %v299
      %v331 = vpop.xlane.xlu0 %330
      %vm332 = vcmask 7168
      %333 = vst.msk [vmem:[#allocation2] sm:$0xff] %vm332, %v301
      %334 = vst.msk [vmem:[#allocation2 + $0x8] sm:$0xff] %vm332, %v303
      %335 = vst.msk [vmem:[#allocation2 + $0x10] sm:$0xff] %vm332, %v305
      %336 = vst.msk [vmem:[#allocation2 + $0x18] sm:$0xff] %vm332, %v307
      %337 = vst.msk [vmem:[#allocation2 + $0x20] sm:$0xff] %vm332, %v309
      %338 = vst.msk [vmem:[#allocation2 + $0x28] sm:$0xff] %vm332, %v311
      %339 = vst.msk [vmem:[#allocation2 + $0x30] sm:$0xff] %vm332, %v313
      %340 = vst.msk [vmem:[#allocation2 + $0x38] sm:$0xff] %vm332, %v315
      %341 = vst.msk [vmem:[#allocation2 + $0x40] sm:$0xff] %vm332, %v317
      %342 = vst.msk [vmem:[#allocation2 + $0x48] sm:$0xff] %vm332, %v319
      %343 = vst.msk [vmem:[#allocation2 + $0x50] sm:$0xff] %vm332, %v321
      %344 = vst.msk [vmem:[#allocation2 + $0x58] sm:$0xff] %vm332, %v323
      %345 = vst.msk [vmem:[#allocation2 + $0x60] sm:$0xff] %vm332, %v325
      %346 = vst.msk [vmem:[#allocation2 + $0x68] sm:$0xff] %vm332, %v327
      %347 = vst.msk [vmem:[#allocation2 + $0x70] sm:$0xff] %vm332, %v329
      %348 = vst.msk [vmem:[#allocation2 + $0x78] sm:$0xff] %vm332, %v331
      %v349 = vsub.f32 %v284, %v301
      %v350 = vsub.f32 %v285, %v303
      %v351 = vsub.f32 %v286, %v305
      %v352 = vsub.f32 %v287, %v307
      %v353 = vsub.f32 %v288, %v309
      %v354 = vsub.f32 %v289, %v311
      %v355 = vsub.f32 %v290, %v313
      %v356 = vsub.f32 %v291, %v315
      %v357 = vsub.f32 %v292, %v317
      %v358 = vsub.f32 %v293, %v319
      %v359 = vsub.f32 %v294, %v321
      %v360 = vsub.f32 %v295, %v323
      %v361 = vsub.f32 %v296, %v325
      %v362 = vsub.f32 %v297, %v327
      %v363 = vsub.f32 %v298, %v329
      %v364 = vsub.f32 %v299, %v331
      %v365 = vmul.f32 %v349, 1.442695
      %v366 = vpow.pop %v365
      %v367 = vmul.f32 %v350, 1.442695
      %v368 = vpow.pop %v367
      %v369 = vmul.f32 %v351, 1.442695
      %v370 = vpow.pop %v369
      %v371 = vmul.f32 %v352, 1.442695
      %v372 = vpow.pop %v371
      %v373 = vmul.f32 %v353, 1.442695
      %v374 = vpow.pop %v373
      %v375 = vmul.f32 %v354, 1.442695
      %v376 = vpow.pop %v375
      %v377 = vmul.f32 %v355, 1.442695
      %v378 = vpow.pop %v377
      %v379 = vmul.f32 %v356, 1.442695
      %v380 = vpow.pop %v379
      %v381 = vmul.f32 %v357, 1.442695
      %v382 = vpow.pop %v381
      %v383 = vmul.f32 %v358, 1.442695
      %v384 = vpow.pop %v383
      %v385 = vmul.f32 %v359, 1.442695
      %v386 = vpow.pop %v385
      %v387 = vmul.f32 %v360, 1.442695
      %v388 = vpow.pop %v387
      %v389 = vmul.f32 %v361, 1.442695
      %v390 = vpow.pop %v389
      %v391 = vmul.f32 %v362, 1.442695
      %v392 = vpow.pop %v391
      %v393 = vmul.f32 %v363, 1.442695
      %v394 = vpow.pop %v393
      %v395 = vmul.f32 %v364, 1.442695
      %v396 = vpow.pop %v395
      %397 = vadd.xlane.f32.xlu0 %v366
      %v398 = vpop.xlane.xlu0 %397
      %399 = vadd.xlane.f32.xlu0 %v368
      %v400 = vpop.xlane.xlu0 %399
      %401 = vadd.xlane.f32.xlu0 %v370
      %v402 = vpop.xlane.xlu0 %401
      %403 = vadd.xlane.f32.xlu0 %v372
      %v404 = vpop.xlane.xlu0 %403
      %405 = vadd.xlane.f32.xlu0 %v374
      %v406 = vpop.xlane.xlu0 %405
      %407 = vadd.xlane.f32.xlu0 %v376
      %v408 = vpop.xlane.xlu0 %407
      %409 = vadd.xlane.f32.xlu0 %v378
      %v410 = vpop.xlane.xlu0 %409
      %411 = vadd.xlane.f32.xlu0 %v380
      %v412 = vpop.xlane.xlu0 %411
      %413 = vadd.xlane.f32.xlu0 %v382
      %v414 = vpop.xlane.xlu0 %413
      %415 = vadd.xlane.f32.xlu0 %v384
      %v416 = vpop.xlane.xlu0 %415
      %417 = vadd.xlane.f32.xlu0 %v386
      %v418 = vpop.xlane.xlu0 %417
      %419 = vadd.xlane.f32.xlu0 %v388
      %v420 = vpop.xlane.xlu0 %419
      %421 = vadd.xlane.f32.xlu0 %v390
      %v422 = vpop.xlane.xlu0 %421
      %423 = vadd.xlane.f32.xlu0 %v392
      %v424 = vpop.xlane.xlu0 %423
      %425 = vadd.xlane.f32.xlu0 %v394
      %v426 = vpop.xlane.xlu0 %425
      %427 = vadd.xlane.f32.xlu0 %v396
      %v428 = vpop.xlane.xlu0 %427
      %429 = vst.msk [vmem:[#allocation3] sm:$0xff] %vm332, %v398
      %430 = vst.msk [vmem:[#allocation3 + $0x8] sm:$0xff] %vm332, %v400
      %431 = vst.msk [vmem:[#allocation3 + $0x10] sm:$0xff] %vm332, %v402
      %432 = vst.msk [vmem:[#allocation3 + $0x18] sm:$0xff] %vm332, %v404
      %433 = vst.msk [vmem:[#allocation3 + $0x20] sm:$0xff] %vm332, %v406
      %434 = vst.msk [vmem:[#allocation3 + $0x28] sm:$0xff] %vm332, %v408
      %435 = vst.msk [vmem:[#allocation3 + $0x30] sm:$0xff] %vm332, %v410
      %436 = vst.msk [vmem:[#allocation3 + $0x38] sm:$0xff] %vm332, %v412
      %437 = vst.msk [vmem:[#allocation3 + $0x40] sm:$0xff] %vm332, %v414
      %438 = vst.msk [vmem:[#allocation3 + $0x48] sm:$0xff] %vm332, %v416
      %439 = vst.msk [vmem:[#allocation3 + $0x50] sm:$0xff] %vm332, %v418
      %440 = vst.msk [vmem:[#allocation3 + $0x58] sm:$0xff] %vm332, %v420
      %441 = vst.msk [vmem:[#allocation3 + $0x60] sm:$0xff] %vm332, %v422
      %442 = vst.msk [vmem:[#allocation3 + $0x68] sm:$0xff] %vm332, %v424
      %443 = vst.msk [vmem:[#allocation3 + $0x70] sm:$0xff] %vm332, %v426
      %444 = vst.msk [vmem:[#allocation3 + $0x78] sm:$0xff] %vm332, %v428
    $region33: #{tpu_custom_call.1} parent=1 // pred_fallthru
      _
    %v445 = vld [vmem:[#allocation2] sm:$0xff]
    %v446 = vld [vmem:[#allocation2 + $0x8] sm:$0xff]
    %v447 = vld [vmem:[#allocation2 + $0x10] sm:$0xff]
    %v448 = vld [vmem:[#allocation2 + $0x18] sm:$0xff]
    %v449 = vld [vmem:[#allocation2 + $0x20] sm:$0xff]
    %v450 = vld [vmem:[#allocation2 + $0x28] sm:$0xff]
    %v451 = vld [vmem:[#allocation2 + $0x30] sm:$0xff]
    %v452 = vld [vmem:[#allocation2 + $0x38] sm:$0xff]
    %v453 = vld [vmem:[#allocation2 + $0x40] sm:$0xff]
    %v454 = vld [vmem:[#allocation2 + $0x48] sm:$0xff]
    %v455 = vld [vmem:[#allocation2 + $0x50] sm:$0xff]
    %v456 = vld [vmem:[#allocation2 + $0x58] sm:$0xff]
    %v457 = vld [vmem:[#allocation2 + $0x60] sm:$0xff]
    %v458 = vld [vmem:[#allocation2 + $0x68] sm:$0xff]
    %v459 = vld [vmem:[#allocation2 + $0x70] sm:$0xff]
    %v460 = vld [vmem:[#allocation2 + $0x78] sm:$0xff]
    %v461 = vld [vmem:[#allocation3] sm:$0xff]
    %v462 = vld [vmem:[#allocation3 + $0x8] sm:$0xff]
    %v463 = vld [vmem:[#allocation3 + $0x10] sm:$0xff]
    %v464 = vld [vmem:[#allocation3 + $0x18] sm:$0xff]
    %v465 = vld [vmem:[#allocation3 + $0x20] sm:$0xff]
    %v466 = vld [vmem:[#allocation3 + $0x28] sm:$0xff]
    %v467 = vld [vmem:[#allocation3 + $0x30] sm:$0xff]
    %v468 = vld [vmem:[#allocation3 + $0x38] sm:$0xff]
    %v469 = vld [vmem:[#allocation3 + $0x40] sm:$0xff]
    %v470 = vld [vmem:[#allocation3 + $0x48] sm:$0xff]
    %v471 = vld [vmem:[#allocation3 + $0x50] sm:$0xff]
    %v472 = vld [vmem:[#allocation3 + $0x58] sm:$0xff]
    %v473 = vld [vmem:[#allocation3 + $0x60] sm:$0xff]
    %v474 = vld [vmem:[#allocation3 + $0x68] sm:$0xff]
    %v475 = vld [vmem:[#allocation3 + $0x70] sm:$0xff]
    %v476 = vld [vmem:[#allocation3 + $0x78] sm:$0xff]
    %477 = vmax.xlane.f32.xlu0 %v264
    %v478 = vpop.xlane.xlu0 %477
    %479 = vmax.xlane.f32.xlu0 %v265
    %v480 = vpop.xlane.xlu0 %479
    %481 = vmax.xlane.f32.xlu0 %v266
    %v482 = vpop.xlane.xlu0 %481
    %483 = vmax.xlane.f32.xlu0 %v267
    %v484 = vpop.xlane.xlu0 %483
    %485 = vmax.xlane.f32.xlu0 %v268
    %v486 = vpop.xlane.xlu0 %485
    %487 = vmax.xlane.f32.xlu0 %v269
    %v488 = vpop.xlane.xlu0 %487
    %489 = vmax.xlane.f32.xlu0 %v270
    %v490 = vpop.xlane.xlu0 %489
    %491 = vmax.xlane.f32.xlu0 %v271
    %v492 = vpop.xlane.xlu0 %491
    %493 = vmax.xlane.f32.xlu0 %v272
    %v494 = vpop.xlane.xlu0 %493
    %495 = vmax.xlane.f32.xlu0 %v273
    %v496 = vpop.xlane.xlu0 %495
    %497 = vmax.xlane.f32.xlu0 %v274
    %v498 = vpop.xlane.xlu0 %497
    %499 = vmax.xlane.f32.xlu0 %v275
    %v500 = vpop.xlane.xlu0 %499
    %501 = vmax.xlane.f32.xlu0 %v276
    %v502 = vpop.xlane.xlu0 %501
    %503 = vmax.xlane.f32.xlu0 %v277
    %v504 = vpop.xlane.xlu0 %503
    %505 = vmax.xlane.f32.xlu0 %v278
    %v506 = vpop.xlane.xlu0 %505
    %507 = vmax.xlane.f32.xlu0 %v279
    %v508 = vpop.xlane.xlu0 %507
    %v509 = vmax.f32 %v445, %v478
    %v510 = vmax.f32 %v446, %v480
    %v511 = vmax.f32 %v447, %v482
    %v512 = vmax.f32 %v448, %v484
    %v513 = vmax.f32 %v449, %v486
    %v514 = vmax.f32 %v450, %v488
    %v515 = vmax.f32 %v451, %v490
    %v516 = vmax.f32 %v452, %v492
    %v517 = vmax.f32 %v453, %v494
    %v518 = vmax.f32 %v454, %v496
    %v519 = vmax.f32 %v455, %v498
    %v520 = vmax.f32 %v456, %v500
    %v521 = vmax.f32 %v457, %v502
    %v522 = vmax.f32 %v458, %v504
    %v523 = vmax.f32 %v459, %v506
    %v524 = vmax.f32 %v460, %v508
    %v525 = vsub.f32 %v445, %v509
    %v526 = vsub.f32 %v446, %v510
    %v527 = vsub.f32 %v447, %v511
    %v528 = vsub.f32 %v448, %v512
    %v529 = vsub.f32 %v449, %v513
    %v530 = vsub.f32 %v450, %v514
    %v531 = vsub.f32 %v451, %v515
    %v532 = vsub.f32 %v452, %v516
    %v533 = vsub.f32 %v453, %v517
    %v534 = vsub.f32 %v454, %v518
    %v535 = vsub.f32 %v455, %v519
    %v536 = vsub.f32 %v456, %v520
    %v537 = vsub.f32 %v457, %v521
    %v538 = vsub.f32 %v458, %v522
    %v539 = vsub.f32 %v459, %v523
    %v540 = vsub.f32 %v460, %v524
    %v541 = vmul.f32 %v525, 1.442695
    %v542 = vpow.pop %v541
    %v543 = vmul.f32 %v526, 1.442695
    %v544 = vpow.pop %v543
    %v545 = vmul.f32 %v527, 1.442695
    %v546 = vpow.pop %v545
    %v547 = vmul.f32 %v528, 1.442695
    %v548 = vpow.pop %v547
    %v549 = vmul.f32 %v529, 1.442695
    %v550 = vpow.pop %v549
    %v551 = vmul.f32 %v530, 1.442695
    %v552 = vpow.pop %v551
    %v553 = vmul.f32 %v531, 1.442695
    %v554 = vpow.pop %v553
    %v555 = vmul.f32 %v532, 1.442695
    %v556 = vpow.pop %v555
    %v557 = vmul.f32 %v533, 1.442695
    %v558 = vpow.pop %v557
    %v559 = vmul.f32 %v534, 1.442695
    %v560 = vpow.pop %v559
    %v561 = vmul.f32 %v535, 1.442695
    %v562 = vpow.pop %v561
    %v563 = vmul.f32 %v536, 1.442695
    %v564 = vpow.pop %v563
    %v565 = vmul.f32 %v537, 1.442695
    %v566 = vpow.pop %v565
    %v567 = vmul.f32 %v538, 1.442695
    %v568 = vpow.pop %v567
    %v569 = vmul.f32 %v539, 1.442695
    %v570 = vpow.pop %v569
    %v571 = vmul.f32 %v540, 1.442695
    %v572 = vpow.pop %v571
    %v573 = vmul.f32 %v461, %v542
    %v574 = vmul.f32 %v462, %v544
    %v575 = vmul.f32 %v463, %v546
    %v576 = vmul.f32 %v464, %v548
    %v577 = vmul.f32 %v465, %v550
    %v578 = vmul.f32 %v466, %v552
    %v579 = vmul.f32 %v467, %v554
    %v580 = vmul.f32 %v468, %v556
    %v581 = vmul.f32 %v469, %v558
    %v582 = vmul.f32 %v470, %v560
    %v583 = vmul.f32 %v471, %v562
    %v584 = vmul.f32 %v472, %v564
    %v585 = vmul.f32 %v473, %v566
    %v586 = vmul.f32 %v474, %v568
    %v587 = vmul.f32 %v475, %v570
    %v588 = vmul.f32 %v476, %v572
    %590 = vset.pattern.permute.xlu0 0
    %591 = vperm.xlu0 %590, %v509
    %v592 = vpop.permute.xlu0 %591
    %595 = vset.pattern.permute.xlu0 0
    %596 = vperm.xlu0 %595, %v510
    %v597 = vpop.permute.xlu0 %596
    %600 = vset.pattern.permute.xlu0 0
    %601 = vperm.xlu0 %600, %v511
    %v602 = vpop.permute.xlu0 %601
    %605 = vset.pattern.permute.xlu0 0
    %606 = vperm.xlu0 %605, %v512
    %v607 = vpop.permute.xlu0 %606
    %610 = vset.pattern.permute.xlu0 0
    %611 = vperm.xlu0 %610, %v513
    %v612 = vpop.permute.xlu0 %611
    %615 = vset.pattern.permute.xlu0 0
    %616 = vperm.xlu0 %615, %v514
    %v617 = vpop.permute.xlu0 %616
    %620 = vset.pattern.permute.xlu0 0
    %621 = vperm.xlu0 %620, %v515
    %v622 = vpop.permute.xlu0 %621
    %625 = vset.pattern.permute.xlu0 0
    %626 = vperm.xlu0 %625, %v516
    %v627 = vpop.permute.xlu0 %626
    %630 = vset.pattern.permute.xlu0 0
    %631 = vperm.xlu0 %630, %v517
    %v632 = vpop.permute.xlu0 %631
    %635 = vset.pattern.permute.xlu0 0
    %636 = vperm.xlu0 %635, %v518
    %v637 = vpop.permute.xlu0 %636
    %640 = vset.pattern.permute.xlu0 0
    %641 = vperm.xlu0 %640, %v519
    %v642 = vpop.permute.xlu0 %641
    %645 = vset.pattern.permute.xlu0 0
    %646 = vperm.xlu0 %645, %v520
    %v647 = vpop.permute.xlu0 %646
    %650 = vset.pattern.permute.xlu0 0
    %651 = vperm.xlu0 %650, %v521
    %v652 = vpop.permute.xlu0 %651
    %655 = vset.pattern.permute.xlu0 0
    %656 = vperm.xlu0 %655, %v522
    %v657 = vpop.permute.xlu0 %656
    %660 = vset.pattern.permute.xlu0 0
    %661 = vperm.xlu0 %660, %v523
    %v662 = vpop.permute.xlu0 %661
    %665 = vset.pattern.permute.xlu0 0
    %666 = vperm.xlu0 %665, %v524
    %v667 = vpop.permute.xlu0 %666
    %v669 = vsub.f32 %v264, %v592
    %v670 = vsub.f32 %v265, %v597
    %v671 = vsub.f32 %v266, %v602
    %v672 = vsub.f32 %v267, %v607
    %v673 = vsub.f32 %v268, %v612
    %v674 = vsub.f32 %v269, %v617
    %v675 = vsub.f32 %v270, %v622
    %v676 = vsub.f32 %v271, %v627
    %v677 = vsub.f32 %v272, %v632
    %v678 = vsub.f32 %v273, %v637
    %v679 = vsub.f32 %v274, %v642
    %v680 = vsub.f32 %v275, %v647
    %v681 = vsub.f32 %v276, %v652
    %v682 = vsub.f32 %v277, %v657
    %v683 = vsub.f32 %v278, %v662
    %v684 = vsub.f32 %v279, %v667
    %v685 = vmul.f32 %v669, 1.442695
    %v686 = vpow.pop %v685
    %v687 = vmul.f32 %v670, 1.442695
    %v688 = vpow.pop %v687
    %v689 = vmul.f32 %v671, 1.442695
    %v690 = vpow.pop %v689
    %v691 = vmul.f32 %v672, 1.442695
    %v692 = vpow.pop %v691
    %v693 = vmul.f32 %v673, 1.442695
    %v694 = vpow.pop %v693
    %v695 = vmul.f32 %v674, 1.442695
    %v696 = vpow.pop %v695
    %v697 = vmul.f32 %v675, 1.442695
    %v698 = vpow.pop %v697
    %v699 = vmul.f32 %v676, 1.442695
    %v700 = vpow.pop %v699
    %v701 = vmul.f32 %v677, 1.442695
    %v702 = vpow.pop %v701
    %v703 = vmul.f32 %v678, 1.442695
    %v704 = vpow.pop %v703
    %v705 = vmul.f32 %v679, 1.442695
    %v706 = vpow.pop %v705
    %v707 = vmul.f32 %v680, 1.442695
    %v708 = vpow.pop %v707
    %v709 = vmul.f32 %v681, 1.442695
    %v710 = vpow.pop %v709
    %v711 = vmul.f32 %v682, 1.442695
    %v712 = vpow.pop %v711
    %v713 = vmul.f32 %v683, 1.442695
    %v714 = vpow.pop %v713
    %v715 = vmul.f32 %v684, 1.442695
    %v716 = vpow.pop %v715
    %717 = vadd.xlane.f32.xlu0 %v686
    %v718 = vpop.xlane.xlu0 %717
    %719 = vadd.xlane.f32.xlu0 %v688
    %v720 = vpop.xlane.xlu0 %719
    %721 = vadd.xlane.f32.xlu0 %v690
    %v722 = vpop.xlane.xlu0 %721
    %723 = vadd.xlane.f32.xlu0 %v692
    %v724 = vpop.xlane.xlu0 %723
    %725 = vadd.xlane.f32.xlu0 %v694
    %v726 = vpop.xlane.xlu0 %725
    %727 = vadd.xlane.f32.xlu0 %v696
    %v728 = vpop.xlane.xlu0 %727
    %729 = vadd.xlane.f32.xlu0 %v698
    %v730 = vpop.xlane.xlu0 %729
    %731 = vadd.xlane.f32.xlu0 %v700
    %v732 = vpop.xlane.xlu0 %731
    %733 = vadd.xlane.f32.xlu0 %v702
    %v734 = vpop.xlane.xlu0 %733
    %735 = vadd.xlane.f32.xlu0 %v704
    %v736 = vpop.xlane.xlu0 %735
    %737 = vadd.xlane.f32.xlu0 %v706
    %v738 = vpop.xlane.xlu0 %737
    %739 = vadd.xlane.f32.xlu0 %v708
    %v740 = vpop.xlane.xlu0 %739
    %741 = vadd.xlane.f32.xlu0 %v710
    %v742 = vpop.xlane.xlu0 %741
    %743 = vadd.xlane.f32.xlu0 %v712
    %v744 = vpop.xlane.xlu0 %743
    %745 = vadd.xlane.f32.xlu0 %v714
    %v746 = vpop.xlane.xlu0 %745
    %747 = vadd.xlane.f32.xlu0 %v716
    %v748 = vpop.xlane.xlu0 %747
    %v749 = vadd.f32 %v573, %v718
    %v750 = vadd.f32 %v574, %v720
    %v751 = vadd.f32 %v575, %v722
    %v752 = vadd.f32 %v576, %v724
    %v753 = vadd.f32 %v577, %v726
    %v754 = vadd.f32 %v578, %v728
    %v755 = vadd.f32 %v579, %v730
    %v756 = vadd.f32 %v580, %v732
    %v757 = vadd.f32 %v581, %v734
    %v758 = vadd.f32 %v582, %v736
    %v759 = vadd.f32 %v583, %v738
    %v760 = vadd.f32 %v584, %v740
    %v761 = vadd.f32 %v585, %v742
    %v762 = vadd.f32 %v586, %v744
    %v763 = vadd.f32 %v587, %v746
    %v764 = vadd.f32 %v588, %v748
    %vm765 = vcmask 7168
    %766 = vst.msk [vmem:[#allocation2] sm:$0xff] %vm765, %v509
    %767 = vst.msk [vmem:[#allocation2 + $0x8] sm:$0xff] %vm765, %v510
    %768 = vst.msk [vmem:[#allocation2 + $0x10] sm:$0xff] %vm765, %v511
    %769 = vst.msk [vmem:[#allocation2 + $0x18] sm:$0xff] %vm765, %v512
    %770 = vst.msk [vmem:[#allocation2 + $0x20] sm:$0xff] %vm765, %v513
    %771 = vst.msk [vmem:[#allocation2 + $0x28] sm:$0xff] %vm765, %v514
    %772 = vst.msk [vmem:[#allocation2 + $0x30] sm:$0xff] %vm765, %v515
    %773 = vst.msk [vmem:[#allocation2 + $0x38] sm:$0xff] %vm765, %v516
    %774 = vst.msk [vmem:[#allocation2 + $0x40] sm:$0xff] %vm765, %v517
    %775 = vst.msk [vmem:[#allocation2 + $0x48] sm:$0xff] %vm765, %v518
    %776 = vst.msk [vmem:[#allocation2 + $0x50] sm:$0xff] %vm765, %v519
    %777 = vst.msk [vmem:[#allocation2 + $0x58] sm:$0xff] %vm765, %v520
    %778 = vst.msk [vmem:[#allocation2 + $0x60] sm:$0xff] %vm765, %v521
    %779 = vst.msk [vmem:[#allocation2 + $0x68] sm:$0xff] %vm765, %v522
    %780 = vst.msk [vmem:[#allocation2 + $0x70] sm:$0xff] %vm765, %v523
    %781 = vst.msk [vmem:[#allocation2 + $0x78] sm:$0xff] %vm765, %v524
    %782 = vst.msk [vmem:[#allocation3] sm:$0xff] %vm765, %v749
    %783 = vst.msk [vmem:[#allocation3 + $0x8] sm:$0xff] %vm765, %v750
    %784 = vst.msk [vmem:[#allocation3 + $0x10] sm:$0xff] %vm765, %v751
    %785 = vst.msk [vmem:[#allocation3 + $0x18] sm:$0xff] %vm765, %v752
    %786 = vst.msk [vmem:[#allocation3 + $0x20] sm:$0xff] %vm765, %v753
    %787 = vst.msk [vmem:[#allocation3 + $0x28] sm:$0xff] %vm765, %v754
    %788 = vst.msk [vmem:[#allocation3 + $0x30] sm:$0xff] %vm765, %v755
    %789 = vst.msk [vmem:[#allocation3 + $0x38] sm:$0xff] %vm765, %v756
    %790 = vst.msk [vmem:[#allocation3 + $0x40] sm:$0xff] %vm765, %v757
    %791 = vst.msk [vmem:[#allocation3 + $0x48] sm:$0xff] %vm765, %v758
    %792 = vst.msk [vmem:[#allocation3 + $0x50] sm:$0xff] %vm765, %v759
    %793 = vst.msk [vmem:[#allocation3 + $0x58] sm:$0xff] %vm765, %v760
    %794 = vst.msk [vmem:[#allocation3 + $0x60] sm:$0xff] %vm765, %v761
    %795 = vst.msk [vmem:[#allocation3 + $0x68] sm:$0xff] %vm765, %v762
    %796 = vst.msk [vmem:[#allocation3 + $0x70] sm:$0xff] %vm765, %v763
    %797 = vst.msk [vmem:[#allocation3 + $0x78] sm:$0xff] %vm765, %v764
    // Predicated region
    $region34: #{tpu_custom_call.1} parent=1 // pred_check
      %p798 = pneg %p280
    $region35: #{tpu_custom_call.1} parent=1 // pred_check_branch
      %800 = sbr.rel (%p798) target = $region37
    $region36: #{tpu_custom_call.1} parent=1 // pred_region
      %v801 = vld [vmem:[#allocation7] sm:$0xff]
      %v802 = vld [vmem:[#allocation7 + $0x8] sm:$0xff]
      %v803 = vld [vmem:[#allocation7 + $0x10] sm:$0xff]
      %v804 = vld [vmem:[#allocation7 + $0x18] sm:$0xff]
      %v805 = vld [vmem:[#allocation7 + $0x20] sm:$0xff]
      %v806 = vld [vmem:[#allocation7 + $0x28] sm:$0xff]
      %v807 = vld [vmem:[#allocation7 + $0x30] sm:$0xff]
      %v808 = vld [vmem:[#allocation7 + $0x38] sm:$0xff]
      %v809 = vld [vmem:[#allocation7 + $0x40] sm:$0xff]
      %v810 = vld [vmem:[#allocation7 + $0x48] sm:$0xff]
      %v811 = vld [vmem:[#allocation7 + $0x50] sm:$0xff]
      %v812 = vld [vmem:[#allocation7 + $0x58] sm:$0xff]
      %v813 = vld [vmem:[#allocation7 + $0x60] sm:$0xff]
      %v814 = vld [vmem:[#allocation7 + $0x68] sm:$0xff]
      %v815 = vld [vmem:[#allocation7 + $0x70] sm:$0xff]
      %v816 = vld [vmem:[#allocation7 + $0x78] sm:$0xff]
      %v817 = vlaneseq
      %v818 = vand.u32 %v817, 127
      %vm819 = vcmp.eq.s32.totalorder %v818, %v169
      %vm820 = vcmp.eq.s32.totalorder %v818, %v172
      %vm821 = vcmp.eq.s32.totalorder %v818, %v175
      %vm822 = vcmp.eq.s32.totalorder %v818, %v178
      %vm823 = vcmp.eq.s32.totalorder %v818, %v181
      %vm824 = vcmp.eq.s32.totalorder %v818, %v184
      %vm825 = vcmp.eq.s32.totalorder %v818, %v187
      %vm826 = vcmp.eq.s32.totalorder %v818, %v190
      %vm827 = vcmp.eq.s32.totalorder %v818, %v193
      %vm828 = vcmp.eq.s32.totalorder %v818, %v196
      %vm829 = vcmp.eq.s32.totalorder %v818, %v199
      %vm830 = vcmp.eq.s32.totalorder %v818, %v202
      %vm831 = vcmp.eq.s32.totalorder %v818, %v205
      %vm832 = vcmp.eq.s32.totalorder %v818, %v208
      %vm833 = vcmp.eq.s32.totalorder %v818, %v211
      %vm834 = vcmp.eq.s32.totalorder %v818, %v214
      %v835 = vsel %vm819, %v801, 0.0
      %v836 = vsel %vm820, %v802, 0.0
      %v837 = vsel %vm821, %v803, 0.0
      %v838 = vsel %vm822, %v804, 0.0
      %v839 = vsel %vm823, %v805, 0.0
      %v840 = vsel %vm824, %v806, 0.0
      %v841 = vsel %vm825, %v807, 0.0
      %v842 = vsel %vm826, %v808, 0.0
      %v843 = vsel %vm827, %v809, 0.0
      %v844 = vsel %vm828, %v810, 0.0
      %v845 = vsel %vm829, %v811, 0.0
      %v846 = vsel %vm830, %v812, 0.0
      %v847 = vsel %vm831, %v813, 0.0
      %v848 = vsel %vm832, %v814, 0.0
      %v849 = vsel %vm833, %v815, 0.0
      %v850 = vsel %vm834, %v816, 0.0
      %851 = vadd.xlane.f32.xlu0 %v835
      %v852 = vpop.xlane.xlu0 %851
      %853 = vadd.xlane.f32.xlu0 %v836
      %v854 = vpop.xlane.xlu0 %853
      %855 = vadd.xlane.f32.xlu0 %v837
      %v856 = vpop.xlane.xlu0 %855
      %857 = vadd.xlane.f32.xlu0 %v838
      %v858 = vpop.xlane.xlu0 %857
      %859 = vadd.xlane.f32.xlu0 %v839
      %v860 = vpop.xlane.xlu0 %859
      %861 = vadd.xlane.f32.xlu0 %v840
      %v862 = vpop.xlane.xlu0 %861
      %863 = vadd.xlane.f32.xlu0 %v841
      %v864 = vpop.xlane.xlu0 %863
      %865 = vadd.xlane.f32.xlu0 %v842
      %v866 = vpop.xlane.xlu0 %865
      %867 = vadd.xlane.f32.xlu0 %v843
      %v868 = vpop.xlane.xlu0 %867
      %869 = vadd.xlane.f32.xlu0 %v844
      %v870 = vpop.xlane.xlu0 %869
      %871 = vadd.xlane.f32.xlu0 %v845
      %v872 = vpop.xlane.xlu0 %871
      %873 = vadd.xlane.f32.xlu0 %v846
      %v874 = vpop.xlane.xlu0 %873
      %875 = vadd.xlane.f32.xlu0 %v847
      %v876 = vpop.xlane.xlu0 %875
      %877 = vadd.xlane.f32.xlu0 %v848
      %v878 = vpop.xlane.xlu0 %877
      %879 = vadd.xlane.f32.xlu0 %v849
      %v880 = vpop.xlane.xlu0 %879
      %881 = vadd.xlane.f32.xlu0 %v850
      %v882 = vpop.xlane.xlu0 %881
      %v883 = vld [vmem:[#allocation2] sm:$0xff]
      %v884 = vld [vmem:[#allocation2 + $0x8] sm:$0xff]
      %v885 = vld [vmem:[#allocation2 + $0x10] sm:$0xff]
      %v886 = vld [vmem:[#allocation2 + $0x18] sm:$0xff]
      %v887 = vld [vmem:[#allocation2 + $0x20] sm:$0xff]
      %v888 = vld [vmem:[#allocation2 + $0x28] sm:$0xff]
      %v889 = vld [vmem:[#allocation2 + $0x30] sm:$0xff]
      %v890 = vld [vmem:[#allocation2 + $0x38] sm:$0xff]
      %v891 = vld [vmem:[#allocation2 + $0x40] sm:$0xff]
      %v892 = vld [vmem:[#allocation2 + $0x48] sm:$0xff]
      %v893 = vld [vmem:[#allocation2 + $0x50] sm:$0xff]
      %v894 = vld [vmem:[#allocation2 + $0x58] sm:$0xff]
      %v895 = vld [vmem:[#allocation2 + $0x60] sm:$0xff]
      %v896 = vld [vmem:[#allocation2 + $0x68] sm:$0xff]
      %v897 = vld [vmem:[#allocation2 + $0x70] sm:$0xff]
      %v898 = vld [vmem:[#allocation2 + $0x78] sm:$0xff]
      %v899 = vld [vmem:[#allocation3] sm:$0xff]
      %v900 = vld [vmem:[#allocation3 + $0x8] sm:$0xff]
      %v901 = vld [vmem:[#allocation3 + $0x10] sm:$0xff]
      %v902 = vld [vmem:[#allocation3 + $0x18] sm:$0xff]
      %v903 = vld [vmem:[#allocation3 + $0x20] sm:$0xff]
      %v904 = vld [vmem:[#allocation3 + $0x28] sm:$0xff]
      %v905 = vld [vmem:[#allocation3 + $0x30] sm:$0xff]
      %v906 = vld [vmem:[#allocation3 + $0x38] sm:$0xff]
      %v907 = vld [vmem:[#allocation3 + $0x40] sm:$0xff]
      %v908 = vld [vmem:[#allocation3 + $0x48] sm:$0xff]
      %v909 = vld [vmem:[#allocation3 + $0x50] sm:$0xff]
      %v910 = vld [vmem:[#allocation3 + $0x58] sm:$0xff]
      %v911 = vld [vmem:[#allocation3 + $0x60] sm:$0xff]
      %v912 = vld [vmem:[#allocation3 + $0x68] sm:$0xff]
      %v913 = vld [vmem:[#allocation3 + $0x70] sm:$0xff]
      %v914 = vld [vmem:[#allocation3 + $0x78] sm:$0xff]
      %v915 = vlog2.pop %v899
      %v916 = vmul.f32 %v915, 0.6931472
      %v917 = vlog2.pop %v900
      %v918 = vmul.f32 %v917, 0.6931472
      %v919 = vlog2.pop %v901
      %v920 = vmul.f32 %v919, 0.6931472
      %v921 = vlog2.pop %v902
      %v922 = vmul.f32 %v921, 0.6931472
      %v923 = vlog2.pop %v903
      %v924 = vmul.f32 %v923, 0.6931472
      %v925 = vlog2.pop %v904
      %v926 = vmul.f32 %v925, 0.6931472
      %v927 = vlog2.pop %v905
      %v928 = vmul.f32 %v927, 0.6931472
      %v929 = vlog2.pop %v906
      %v930 = vmul.f32 %v929, 0.6931472
      %v931 = vlog2.pop %v907
      %v932 = vmul.f32 %v931, 0.6931472
      %v933 = vlog2.pop %v908
      %v934 = vmul.f32 %v933, 0.6931472
      %v935 = vlog2.pop %v909
      %v936 = vmul.f32 %v935, 0.6931472
      %v937 = vlog2.pop %v910
      %v938 = vmul.f32 %v937, 0.6931472
      %v939 = vlog2.pop %v911
      %v940 = vmul.f32 %v939, 0.6931472
      %v941 = vlog2.pop %v912
      %v942 = vmul.f32 %v941, 0.6931472
      %v943 = vlog2.pop %v913
      %v944 = vmul.f32 %v943, 0.6931472
      %v945 = vlog2.pop %v914
      %v946 = vmul.f32 %v945, 0.6931472
      %v947 = vadd.f32 %v883, %v916
      %v948 = vadd.f32 %v884, %v918
      %v949 = vadd.f32 %v885, %v920
      %v950 = vadd.f32 %v886, %v922
      %v951 = vadd.f32 %v887, %v924
      %v952 = vadd.f32 %v888, %v926
      %v953 = vadd.f32 %v889, %v928
      %v954 = vadd.f32 %v890, %v930
      %v955 = vadd.f32 %v891, %v932
      %v956 = vadd.f32 %v892, %v934
      %v957 = vadd.f32 %v893, %v936
      %v958 = vadd.f32 %v894, %v938
      %v959 = vadd.f32 %v895, %v940
      %v960 = vadd.f32 %v896, %v942
      %v961 = vadd.f32 %v897, %v944
      %v962 = vadd.f32 %v898, %v946
      %v963 = vsub.f32 %v947, %v852
      %v964 = vsub.f32 %v948, %v854
      %v965 = vsub.f32 %v949, %v856
      %v966 = vsub.f32 %v950, %v858
      %v967 = vsub.f32 %v951, %v860
      %v968 = vsub.f32 %v952, %v862
      %v969 = vsub.f32 %v953, %v864
      %v970 = vsub.f32 %v954, %v866
      %v971 = vsub.f32 %v955, %v868
      %v972 = vsub.f32 %v956, %v870
      %v973 = vsub.f32 %v957, %v872
      %v974 = vsub.f32 %v958, %v874
      %v975 = vsub.f32 %v959, %v876
      %v976 = vsub.f32 %v960, %v878
      %v977 = vsub.f32 %v961, %v880
      %v978 = vsub.f32 %v962, %v882
      %980 = vset.pattern.permute.xlu0 0
      %981 = vperm.xlu0 %980, %v963
      %v982 = vpop.permute.xlu0 %981
      %985 = vset.pattern.permute.xlu0 0
      %986 = vperm.xlu0 %985, %v964
      %v987 = vpop.permute.xlu0 %986
      %990 = vset.pattern.permute.xlu0 0
      %991 = vperm.xlu0 %990, %v965
      %v992 = vpop.permute.xlu0 %991
      %995 = vset.pattern.permute.xlu0 0
      %996 = vperm.xlu0 %995, %v966
      %v997 = vpop.permute.xlu0 %996
      %1000 = vset.pattern.permute.xlu0 0
      %1001 = vperm.xlu0 %1000, %v967
      %v1002 = vpop.permute.xlu0 %1001
      %1005 = vset.pattern.permute.xlu0 0
      %1006 = vperm.xlu0 %1005, %v968
      %v1007 = vpop.permute.xlu0 %1006
      %1010 = vset.pattern.permute.xlu0 0
      %1011 = vperm.xlu0 %1010, %v969
      %v1012 = vpop.permute.xlu0 %1011
      %1015 = vset.pattern.permute.xlu0 0
      %1016 = vperm.xlu0 %1015, %v970
      %v1017 = vpop.permute.xlu0 %1016
      %1020 = vset.pattern.permute.xlu0 0
      %1021 = vperm.xlu0 %1020, %v971
      %v1022 = vpop.permute.xlu0 %1021
      %1025 = vset.pattern.permute.xlu0 0
      %1026 = vperm.xlu0 %1025, %v972
      %v1027 = vpop.permute.xlu0 %1026
      %1030 = vset.pattern.permute.xlu0 0
      %1031 = vperm.xlu0 %1030, %v973
      %v1032 = vpop.permute.xlu0 %1031
      %1035 = vset.pattern.permute.xlu0 0
      %1036 = vperm.xlu0 %1035, %v974
      %v1037 = vpop.permute.xlu0 %1036
      %1040 = vset.pattern.permute.xlu0 0
      %1041 = vperm.xlu0 %1040, %v975
      %v1042 = vpop.permute.xlu0 %1041
      %1045 = vset.pattern.permute.xlu0 0
      %1046 = vperm.xlu0 %1045, %v976
      %v1047 = vpop.permute.xlu0 %1046
      %1050 = vset.pattern.permute.xlu0 0
      %1051 = vperm.xlu0 %1050, %v977
      %v1052 = vpop.permute.xlu0 %1051
      %1055 = vset.pattern.permute.xlu0 0
      %1056 = vperm.xlu0 %1055, %v978
      %v1057 = vpop.permute.xlu0 %1056
      %1059 = vst [vmem:[#allocation9] sm:$0xff] %v982
      %1060 = vst [vmem:[#allocation9 + $0x8] sm:$0xff] %v987
      %1061 = vst [vmem:[#allocation9 + $0x10] sm:$0xff] %v992
      %1062 = vst [vmem:[#allocation9 + $0x18] sm:$0xff] %v997
      %1063 = vst [vmem:[#allocation9 + $0x20] sm:$0xff] %v1002
      %1064 = vst [vmem:[#allocation9 + $0x28] sm:$0xff] %v1007
      %1065 = vst [vmem:[#allocation9 + $0x30] sm:$0xff] %v1012
      %1066 = vst [vmem:[#allocation9 + $0x38] sm:$0xff] %v1017
      %1067 = vst [vmem:[#allocation9 + $0x40] sm:$0xff] %v1022
      %1068 = vst [vmem:[#allocation9 + $0x48] sm:$0xff] %v1027
      %1069 = vst [vmem:[#allocation9 + $0x50] sm:$0xff] %v1032
      %1070 = vst [vmem:[#allocation9 + $0x58] sm:$0xff] %v1037
      %1071 = vst [vmem:[#allocation9 + $0x60] sm:$0xff] %v1042
      %1072 = vst [vmem:[#allocation9 + $0x68] sm:$0xff] %v1047
      %1073 = vst [vmem:[#allocation9 + $0x70] sm:$0xff] %v1052
      %1074 = vst [vmem:[#allocation9 + $0x78] sm:$0xff] %v1057
    $region37: #{tpu_custom_call.1} parent=1 // pred_fallthru
      _
    // Predicated region
    $region38: #{tpu_custom_call.1} parent=1 // pred_check
      _
    $region39: #{tpu_custom_call.1} parent=1 // pred_check_branch
      %1076 = sbr.rel (0) target = $region41
    $region40: #{tpu_custom_call.1} parent=1 // pred_region
      %1078 = vsyncadd [#allocation6], 0
      %s1079 = sshll.u32 [#allocation9], 4
      %s1080 = int_to_ptr.vmem [resolvable:$true] %s1079
      %s1081 = sshll.u32 %s5, 4
      %s1082 = int_to_ptr.hbm [resolvable:$true] %s1081
      %1087 = dma.vmem_to_hbm [thread:$0]  %s1080, 2048, %s1082, [#allocation6], 128, 128, 8
    $region41: #{tpu_custom_call.1} parent=1 // pred_fallthru
      _
    // Predicated region
    $region42: #{tpu_custom_call.1} parent=1 // pred_check
      _
    $region43: #{tpu_custom_call.1} parent=1 // pred_check_branch
      %1089 = sbr.rel (0) target = $region45
    $region44: #{tpu_custom_call.1} parent=1 // pred_region
      %1091 = dma.done [#allocation6], 2048
    $region45: #{tpu_custom_call.1} parent=1 // pred_fallthru
      _
    %1092 = vsyncpa [#allocation5], 1
    %1093 = vsyncpa [#allocation8], 1
    %1094 = vsyncpa [#allocation6], 1

</llo_original>
